<compile_context>
chip_gen: v7x
topology: tpu7x:2x2x1
jax: 0.10.0
libtpu: 0.0.40
codegen_flags: <defaults>
</compile_context>

<pallas_src>
import functools

import jax
import jax.numpy as jnp
from jax.experimental import pallas as pl
from jax.experimental.pallas import tpu as pltpu

LANE = 128      # lane width
TR_MAX = 4096   # max sublane rows per grid step (2 MiB f32 per input block)


def _round_down(x, m):
    return (x // m) * m


def _num_tensorcores():
    """2 on v7x-class chips (2 TC/chip), 1 on v5e/v6e.  Conservative on failure."""
    try:
        kind = jax.devices()[0].device_kind.lower()
        if "v7" in kind or "tpu7" in kind:
            return 2
    except Exception:
        pass
    return 1


def _focal_loss_kernel(x_ref, t_ref, o_ref, *, gamma, binary_targets, reduce_axis):
    # o_ref is the per-core (8, 128) partial-sum accumulator (revisited output block).
    @pl.when(pl.program_id(reduce_axis) == 0)
    def _():
        o_ref[...] = jnp.zeros(o_ref.shape, o_ref.dtype)

    p = x_ref[...].astype(jnp.float32)
    t = t_ref[...].astype(jnp.float32)

    if binary_targets:
        # For t in {0,1}: q = p^t (1-p)^(1-t) = exp(-bce) = pt (to within the e^-100
        # clamp), so one log per element replaces 2 logs + 1 exp.
        q = t * p + (1.0 - t) * (1.0 - p)
        bce = -jnp.maximum(jnp.log(q), -100.0)
        one_m_pt = 1.0 - q
    else:
        # Exact PyTorch BCELoss: clamp each log at -100 BEFORE the blend with t.
        log_p = jnp.maximum(jnp.log(p), -100.0)
        log_1mp = jnp.maximum(jnp.log(1.0 - p), -100.0)
        bce = -(log_1mp + t * (log_p - log_1mp))
        one_m_pt = 1.0 - jnp.exp(-bce)

    if gamma == 2.0:
        pow_term = one_m_pt * one_m_pt      # multiply fast path, no pow (exp/log)
    else:
        pow_term = one_m_pt ** gamma
    focal = pow_term * bce                  # alpha applied once in the wrapper

    # Fold TR rows down to one (8, 128) vreg with pure VPU adds; accumulate into the
    # resident output block (no per-step cross-lane reduce).
    tr = focal.shape[0]
    partial = focal.reshape(tr // 8, 8, LANE).sum(axis=0)
    o_ref[...] = o_ref[...] + partial


def _focal_sum_flat(p, t, gamma, binary_targets):
    """Plain-JAX sum of the (un-normalized, alpha-free) focal terms; same math."""
    p = p.astype(jnp.float32)
    t = t.astype(jnp.float32)
    if binary_targets:
        q = t * p + (1.0 - t) * (1.0 - p)
        bce = -jnp.maximum(jnp.log(q), -100.0)
        one_m_pt = 1.0 - q
    else:
        log_p = jnp.maximum(jnp.log(p), -100.0)
        log_1mp = jnp.maximum(jnp.log(1.0 - p), -100.0)
        bce = -(log_1mp + t * (log_p - log_1mp))
        one_m_pt = 1.0 - jnp.exp(-bce)
    pow_term = one_m_pt * one_m_pt if float(gamma) == 2.0 else one_m_pt ** gamma
    return jnp.sum(pow_term * bce)


def focal_loss(inputs, targets, alpha=0.25, gamma=2.0, binary_targets=False):
    """Pallas TPU FocalLoss.forward. Returns a scalar (float32).

    binary_targets=True enables the 1-log fast path (only valid for t in {0,1});
    the default general path matches PyTorch BCELoss for soft targets too.
    """
    if not jnp.issubdtype(targets.dtype, jnp.floating):
        targets = targets.astype(jnp.float32)

    x = inputs.reshape(-1)
    t = targets.reshape(-1)
    n = x.shape[0]
    alpha = float(alpha)
    gamma = float(gamma)

    # Sublane multiple per dtype (8 for 32-bit, 16 for bf16, 32 for 8-bit).
    sub_mult = 8
    for dt in (x.dtype, t.dtype):
        sub_mult = max(sub_mult, 32 // max(jnp.dtype(dt).itemsize, 1))

    rows_full = n // LANE
    ncores = _num_tensorcores()
    if rows_full // max(ncores, 1) < sub_mult:
        ncores = 1

    if rows_full < sub_mult:
        # Tiny input: not even one full tile; do it in plain JAX (same math).
        return _focal_sum_flat(x, t, gamma, binary_targets) * (alpha / n)

    tr = min(TR_MAX, _round_down(rows_full // ncores, sub_mult))
    inner = rows_full // (ncores * tr)
    rows_main = inner * ncores * tr
    main_elems = rows_main * LANE

    # Lane-aligned inputs reshape for free; the grid simply only touches the first
    # rows_main rows.  Only an unaligned n needs the one prefix slice.
    if n % LANE == 0:
        xp = x.reshape(-1, LANE)
        tp = t.reshape(-1, LANE)
    else:
        xp = x[:main_elems].reshape(-1, LANE)
        tp = t[:main_elems].reshape(-1, LANE)

    # Input blocks are double-buffered; leave headroom for full-block f32 temporaries.
    blk_in_bytes = tr * LANE * (jnp.dtype(xp.dtype).itemsize + jnp.dtype(tp.dtype).itemsize)
    vmem_limit = int(min(2 * blk_in_bytes + 8 * tr * LANE * 4 + (2 << 20), 64 << 20))
    vmem_limit = max(vmem_limit, 16 << 20)

    kernel = functools.partial(
        _focal_loss_kernel, gamma=gamma, binary_targets=bool(binary_targets),
        reduce_axis=1 if ncores > 1 else 0)

    if ncores > 1:
        grid = (ncores, inner)
        in_idx = lambda c, i: (c * inner + i, 0)
        out_idx = lambda c, i: (c, 0, 0)
        dims = (pltpu.CORE_PARALLEL, pltpu.ARBITRARY)   # real TC split on v7x
    else:
        grid = (inner,)
        in_idx = lambda i: (i, 0)
        out_idx = lambda i: (0, 0, 0)
        dims = (pltpu.ARBITRARY,)

    partials = pl.pallas_call(
        kernel,
        out_shape=jax.ShapeDtypeStruct((ncores, 8, LANE), jnp.float32),
        grid_spec=pltpu.PrefetchScalarGridSpec(
            num_scalar_prefetch=0,
            grid=grid,
            in_specs=[
                pl.BlockSpec((tr, LANE), in_idx),
                pl.BlockSpec((tr, LANE), in_idx),
            ],
            # Per-core (8,128) partial-sum slab; revisited across the inner axis.
            out_specs=pl.BlockSpec((None, 8, LANE), out_idx),
        ),
        compiler_params=pltpu.CompilerParams(
            dimension_semantics=dims,
            vmem_limit_bytes=vmem_limit),
    )(xp, tp)

    total = jnp.sum(partials)
    if main_elems < n:
        # Ragged tail (< ncores*tr*128 elements): fused elementwise+reduce in JAX,
        # avoiding any full-array pad/copy of the inputs.
        total = total + _focal_sum_flat(x[main_elems:], t[main_elems:], gamma, binary_targets)

    # Mean over the ORIGINAL element count; alpha hoisted out of the kernel.
    return total * (alpha / n)


def focal_loss_ref(inputs, targets, alpha=0.25, gamma=2.0):
    """Pure-JAX reference (mirrors PyTorch semantics literally)."""
    p = inputs.astype(jnp.float32)
    t = targets.astype(jnp.float32)
    log_p = jnp.maximum(jnp.log(p), -100.0)
    log_1mp = jnp.maximum(jnp.log(1.0 - p), -100.0)
    bce = -(t * log_p + (1.0 - t) * log_1mp)
    pt = jnp.exp(-bce)
    return jnp.mean(alpha * (1.0 - pt) ** gamma * bce)


if __name__ == "__main__":
    key = jax.random.PRNGKey(0)
    k1, k2, k3, k4 = jax.random.split(key, 4)

    # Inputs are probabilities (BCELoss requires values in [0, 1]); targets in {0, 1}.
    # Typical NCHW activation block: (2, 4, 16, 16)  -> 2048 elements, lane-aligned.
    logits = jax.random.normal(k1, (2, 4, 16, 16), dtype=jnp.float32)
    inputs = jax.nn.sigmoid(logits)
    targets = (jax.random.uniform(k2, (2, 4, 16, 16)) > 0.5).astype(jnp.float32)

    ref = focal_loss_ref(inputs, targets, alpha=0.25, gamma=2.0)
    out_general = focal_loss(inputs, targets, alpha=0.25, gamma=2.0)
    out_binary = focal_loss(inputs, targets, alpha=0.25, gamma=2.0, binary_targets=True)
    jax.block_until_ready((out_general, out_binary))
    assert jnp.allclose(out_general, ref, rtol=2e-5, atol=1e-6), (out_general, ref)
    assert jnp.allclose(out_binary, ref, rtol=2e-5, atol=1e-6), (out_binary, ref)

    # Unaligned size exercises the kernel-prefix + JAX-tail path (no pad copy).
    logits2 = jax.random.normal(k3, (3, 5, 7, 11), dtype=jnp.float32)
    inputs2 = jax.nn.sigmoid(logits2)
    targets2 = (jax.random.uniform(k4, (3, 5, 7, 11)) > 0.5).astype(jnp.float32)
    ref2 = focal_loss_ref(inputs2, targets2)
    out2 = focal_loss(inputs2, targets2)
    jax.block_until_ready(out2)
    assert jnp.allclose(out2, ref2, rtol=2e-5, atol=1e-6), (out2, ref2)

    print("KERNEL_OK")
</pallas_src>

<mosaic_0001>
module attributes {stable_mosaic.version = 11 : i64} {
  func.func @_focal_loss_kernel(%arg0: i32, %arg1: memref<16x128xf32, #tpu.memory_space<vmem>>, %arg2: memref<16x128xf32, #tpu.memory_space<vmem>>, %arg3: memref<1x8x128xf32, #tpu.memory_space<vmem>>) attributes {dimension_semantics = [#tpu.dimension_semantics<arbitrary>], iteration_bounds = array<i64: 1>, scalar_prefetch = 0 : i64, scratch_operands = 0 : i64, tpu.core_type = #tpu.core_type<tc>, window_params = [{transform_indices = @transform_0, window_bounds = array<i64: 16, 128>}, {transform_indices = @transform_1, window_bounds = array<i64: 16, 128>}, {pipeline_mode = #tpu.pipeline_mode<synchronous>, transform_indices = @transform_2, window_bounds = array<i64: 1, 8, 128>}]} {
    %c0_i32 = arith.constant 0 : i32
    %0 = arith.cmpi eq, %arg0, %c0_i32 : i32
    %1 = arith.extui %0 : i1 to i32
    %c0_i32_0 = arith.constant 0 : i32
    %2 = arith.cmpi ne, %1, %c0_i32_0 : i32
    scf.if %2 {
      %cst_16 = arith.constant 0.000000e+00 : f32
      %33 = vector.broadcast %cst_16 : f32 to vector<8x128xf32>
      %c0_17 = arith.constant 0 : index
      %c0_18 = arith.constant 0 : index
      %c0_19 = arith.constant 0 : index
      %34 = vector.load %arg3[%c0_17, %c0_18, %c0_19] : memref<1x8x128xf32, #tpu.memory_space<vmem>>, vector<1x8x128xf32>
      %35 = vector.shape_cast %34 : vector<1x8x128xf32> to vector<8x128xf32>
      %36 = vector.shape_cast %33 : vector<8x128xf32> to vector<1x8x128xf32>
      tpu.vector_store %arg3[%c0_17, %c0_18, %c0_19], %36 {strides = array<i32>} : memref<1x8x128xf32, #tpu.memory_space<vmem>>, vector<1x8x128xf32>,
    } else {
    }
    %c0 = arith.constant 0 : index
    %c0_1 = arith.constant 0 : index
    %3 = vector.load %arg1[%c0, %c0_1] : memref<16x128xf32, #tpu.memory_space<vmem>>, vector<16x128xf32>
    %c0_2 = arith.constant 0 : index
    %c0_3 = arith.constant 0 : index
    %4 = vector.load %arg2[%c0_2, %c0_3] : memref<16x128xf32, #tpu.memory_space<vmem>>, vector<16x128xf32>
    %5 = math.log %3 : vector<16x128xf32>
    %cst = arith.constant -1.000000e+02 : f32
    %6 = vector.broadcast %cst : f32 to vector<16x128xf32>
    %7 = arith.maximumf %5, %6 : vector<16x128xf32>
    %cst_4 = arith.constant 1.000000e+00 : f32
    %8 = vector.broadcast %cst_4 : f32 to vector<16x128xf32>
    %9 = arith.subf %8, %3 : vector<16x128xf32>
    %10 = math.log %9 : vector<16x128xf32>
    %cst_5 = arith.constant -1.000000e+02 : f32
    %11 = vector.broadcast %cst_5 : f32 to vector<16x128xf32>
    %12 = arith.maximumf %10, %11 : vector<16x128xf32>
    %13 = arith.subf %7, %12 : vector<16x128xf32>
    %14 = arith.mulf %4, %13 : vector<16x128xf32>
    %15 = arith.addf %12, %14 : vector<16x128xf32>
    %cst_6 = arith.constant 0.000000e+00 : f32
    %16 = vector.broadcast %cst_6 : f32 to vector<16x128xf32>
    %17 = arith.subf %16, %15 : vector<16x128xf32>
    %cst_7 = arith.constant 0.000000e+00 : f32
    %18 = vector.broadcast %cst_7 : f32 to vector<16x128xf32>
    %19 = arith.subf %18, %17 : vector<16x128xf32>
    %20 = math.exp %19 : vector<16x128xf32>
    %cst_8 = arith.constant 1.000000e+00 : f32
    %21 = vector.broadcast %cst_8 : f32 to vector<16x128xf32>
    %22 = arith.subf %21, %20 : vector<16x128xf32>
    %23 = arith.mulf %22, %22 : vector<16x128xf32>
    %24 = arith.mulf %23, %17 : vector<16x128xf32>
    %25 = vector.shape_cast %24 : vector<16x128xf32> to vector<2x8x128xf32>
    %cst_9 = arith.constant dense<0.000000e+00> : vector<8x128xf32>
    %26 = vector.multi_reduction <add>, %25, %cst_9 [0] : vector<2x8x128xf32> to vector<8x128xf32>
    %c0_10 = arith.constant 0 : index
    %c0_11 = arith.constant 0 : index
    %c0_12 = arith.constant 0 : index
    %27 = vector.load %arg3[%c0_10, %c0_11, %c0_12] : memref<1x8x128xf32, #tpu.memory_space<vmem>>, vector<1x8x128xf32>
    %28 = vector.shape_cast %27 : vector<1x8x128xf32> to vector<8x128xf32>
    %29 = arith.addf %28, %26 : vector<8x128xf32>
    %c0_13 = arith.constant 0 : index
    %c0_14 = arith.constant 0 : index
    %c0_15 = arith.constant 0 : index
    %30 = vector.load %arg3[%c0_13, %c0_14, %c0_15] : memref<1x8x128xf32, #tpu.memory_space<vmem>>, vector<1x8x128xf32>
    %31 = vector.shape_cast %30 : vector<1x8x128xf32> to vector<8x128xf32>
    %32 = vector.shape_cast %29 : vector<8x128xf32> to vector<1x8x128xf32>
    tpu.vector_store %arg3[%c0_13, %c0_14, %c0_15], %32 {strides = array<i32>} : memref<1x8x128xf32, #tpu.memory_space<vmem>>, vector<1x8x128xf32>,
    return
  }
  func.func @transform_0(%arg0: i32) -> (i32, i32) {
    %c0_i32 = arith.constant 0 : i32
    %c0_i32_0 = arith.constant 0 : i32
    return %arg0, %c0_i32 : i32, i32
  }
  func.func @transform_1(%arg0: i32) -> (i32, i32) {
    %c0_i32 = arith.constant 0 : i32
    %c0_i32_0 = arith.constant 0 : i32
    return %arg0, %c0_i32 : i32, i32
  }
  func.func @transform_2(%arg0: i32) -> (i32, i32, i32) {
    %c0_i32 = arith.constant 0 : i32
    %c0_i32_0 = arith.constant 0 : i32
    %c0_i32_1 = arith.constant 0 : i32
    %c0_i32_2 = arith.constant 0 : i32
    return %c0_i32, %c0_i32_0, %c0_i32_1 : i32, i32, i32
  }
}

</mosaic_0001>

<llo_original>
// kernel: tpu_custom_call.1
$region0: #{tpu_custom_call.1}
  #allocation0 [shape = 'u32[]', space=smem, size = 0x4, offset = 0x4, fixed_abs, tag = 'smem constant byte address 0x4 - core index']
  #allocation1 [shape = 'u32[144,128]{1,0:T(1,128)}', space=vmem, size = 0x12000, scoped, tag = 'internal scratch']
  %s0 = inlined_call_operand.hbm [shape: f32[16,128], index: 0, kind: input, shape index: {}]
  %s1 = inlined_call_operand.hbm [shape: f32[16,128], index: 1, kind: input, shape index: {}]
  %s2 = inlined_call_operand.hbm [shape: f32[1,8,128], index: 2, kind: output, shape index: {}]
  %s3 = sld [smem:[#allocation0]]
  $region30: #{tpu_custom_call.1} parent=0
    _
  %s5 = ssub.s32 1, %s3
  %s6 = scalar_select 0, %s5, %s3
  $region1: #{tpu_custom_call.1} parent=0
    #allocation2 [shape = 'u8[8192]{0}', space=vmem, size = 0x2000, scoped, tag = 'input window, operand 0, single buffered']
    #allocation3 [shape = 's32[1]{0}', space=sflag, size = 0x4, scoped, tag = 'scoped memory for tpu_custom_call.1']
    #allocation4 [shape = 's32[1]{0}', space=sflag, size = 0x4, scoped, tag = 'scoped memory for tpu_custom_call.1']
    #allocation5 [shape = 'u8[8192]{0}', space=vmem, size = 0x2000, scoped, tag = 'input window, operand 1, single buffered']
    #allocation6 [shape = 's32[1]{0}', space=sflag, size = 0x4, scoped, tag = 'scoped memory for tpu_custom_call.1']
    #allocation7 [shape = 'u8[4096]{0}', space=vmem, size = 0x1000, scoped, tag = 'output window, operand 0, single buffered']
    %7 = vsyncpa [#allocation3], 0
    %8 = vsyncpa [#allocation6], 0
    %9 = vsyncpa [#allocation4], 0
    // Predicated region
    $region2: #{tpu_custom_call.1} parent=1 // pred_check
      _
    $region3: #{tpu_custom_call.1} parent=1 // pred_check_branch
      %11 = sbr.rel (0) target = $region5
    $region4: #{tpu_custom_call.1} parent=1 // pred_region
      %s13 = ssub.s32 256, 256
      %14 = vsyncadd [#allocation3], %s13
      %s15 = sshll.u32 [#allocation2], 4
      %s16 = int_to_ptr.vmem [resolvable:$true] %s15
      %21 = dma.hbm_to_vmem [thread:$0]  %s0, 256, %s16, [#allocation3], 128, 128, 8
    $region5: #{tpu_custom_call.1} parent=1 // pred_fallthru
      _
    // Predicated region
    $region6: #{tpu_custom_call.1} parent=1 // pred_check
      _
    $region7: #{tpu_custom_call.1} parent=1 // pred_check_branch
      %23 = sbr.rel (0) target = $region9
    $region8: #{tpu_custom_call.1} parent=1 // pred_region
      %s25 = ssub.s32 256, 256
      %26 = vsyncadd [#allocation6], %s25
      %s27 = sshll.u32 [#allocation5], 4
      %s28 = int_to_ptr.vmem [resolvable:$true] %s27
      %33 = dma.hbm_to_vmem [thread:$0]  %s1, 256, %s28, [#allocation6], 128, 128, 8
    $region9: #{tpu_custom_call.1} parent=1 // pred_fallthru
      _
    // Predicated region
    $region10: #{tpu_custom_call.1} parent=1 // pred_check
      _
    $region11: #{tpu_custom_call.1} parent=1 // pred_check_branch
      %35 = sbr.rel (0) target = $region13
    $region12: #{tpu_custom_call.1} parent=1 // pred_region
      %36 = dma.done [#allocation3], 256
    $region13: #{tpu_custom_call.1} parent=1 // pred_fallthru
      _
    // Predicated region
    $region14: #{tpu_custom_call.1} parent=1 // pred_check
      _
    $region15: #{tpu_custom_call.1} parent=1 // pred_check_branch
      %38 = sbr.rel (0) target = $region17
    $region16: #{tpu_custom_call.1} parent=1 // pred_region
      %39 = dma.done [#allocation6], 256
    $region17: #{tpu_custom_call.1} parent=1 // pred_fallthru
      _
    %p40 = scmp.eq.s32.totalorder 0, 0
    // Predicated region
    $region18: #{tpu_custom_call.1} parent=1 // pred_check
      %p41 = pneg %p40
    $region19: #{tpu_custom_call.1} parent=1 // pred_check_branch
      %43 = sbr.rel (%p41) target = $region21
    $region20: #{tpu_custom_call.1} parent=1 // pred_region
      %44 = vst [vmem:[#allocation7] sm:$0xff] 0.0
    $region21: #{tpu_custom_call.1} parent=1 // pred_fallthru
      _
    %v45 = vld [vmem:[#allocation2] sm:$0xff]
    %v46 = vld [vmem:[#allocation2 + $0x8] sm:$0xff]
    %v47 = vld [vmem:[#allocation5] sm:$0xff]
    %v48 = vld [vmem:[#allocation5 + $0x8] sm:$0xff]
    %v49 = vlog2.pop %v45
    %v50 = vmul.f32 %v49, 0.6931472
    %v51 = vlog2.pop %v46
    %v52 = vmul.f32 %v51, 0.6931472
    %v53 = vmax.f32 %v50, -100.0
    %v54 = vmax.f32 %v52, -100.0
    %v55 = vsub.f32 1.0, %v45
    %v56 = vsub.f32 1.0, %v46
    %v57 = vlog2.pop %v55
    %v58 = vmul.f32 %v57, 0.6931472
    %v59 = vlog2.pop %v56
    %v60 = vmul.f32 %v59, 0.6931472
    %v61 = vmax.f32 %v58, -100.0
    %v62 = vmax.f32 %v60, -100.0
    %v63 = vsub.f32 %v53, %v61
    %v64 = vsub.f32 %v54, %v62
    %v65 = vmul.f32 %v47, %v63
    %v66 = vmul.f32 %v48, %v64
    %v67 = vadd.f32 %v61, %v65
    %v68 = vadd.f32 %v62, %v66
    %v69 = vsub.f32 0.0, %v67
    %v70 = vsub.f32 0.0, %v68
    %v71 = vsub.f32 0.0, %v69
    %v72 = vsub.f32 0.0, %v70
    %v73 = vmul.f32 %v71, 1.442695
    %v74 = vpow.pop %v73
    %v75 = vmul.f32 %v72, 1.442695
    %v76 = vpow.pop %v75
    %v77 = vsub.f32 1.0, %v74
    %v78 = vsub.f32 1.0, %v76
    %v79 = vmul.f32 %v77, %v77
    %v80 = vmul.f32 %v78, %v78
    %v81 = vmul.f32 %v79, %v69
    %v82 = vmul.f32 %v80, %v70
    %v83 = vadd.f32 %v81, %v82
    %v84 = vld [vmem:[#allocation7] sm:$0xff]
    %v85 = vadd.f32 %v84, %v83
    %86 = vst [vmem:[#allocation7] sm:$0xff] %v85
    // Predicated region
    $region22: #{tpu_custom_call.1} parent=1 // pred_check
      _
    $region23: #{tpu_custom_call.1} parent=1 // pred_check_branch
      %88 = sbr.rel (0) target = $region25
    $region24: #{tpu_custom_call.1} parent=1 // pred_region
      %s90 = ssub.s32 128, 128
      %91 = vsyncadd [#allocation4], %s90
      %s93 = sshll.u32 [#allocation7], 4
      %s94 = int_to_ptr.vmem [resolvable:$true] %s93
      %96 = dma.vmem_to_hbm [thread:$0]  %s94, 128, %s2, [#allocation4]
    $region25: #{tpu_custom_call.1} parent=1 // pred_fallthru
      _
    // Predicated region
    $region26: #{tpu_custom_call.1} parent=1 // pred_check
      _
    $region27: #{tpu_custom_call.1} parent=1 // pred_check_branch
      %98 = sbr.rel (0) target = $region29
    $region28: #{tpu_custom_call.1} parent=1 // pred_region
      %99 = dma.done [#allocation4], 128
    $region29: #{tpu_custom_call.1} parent=1 // pred_fallthru
      _
    %100 = vsyncpa [#allocation3], 1
    %101 = vsyncpa [#allocation6], 1
    %102 = vsyncpa [#allocation4], 1

</llo_original>
